<compile_context>
chip_gen: v7x
topology: tpu7x:2x2x1
jax: 0.10.0
libtpu: 0.0.40
codegen_flags: <defaults>
</compile_context>

<pallas_src>
import jax
import jax.numpy as jnp
from jax.experimental import pallas as pl
from jax.experimental.pallas import tpu as pltpu

EPS = 1e-5
_MIB = 1024 * 1024


def prenorm_kernel(x_ref, g_ref, b_ref, w_ref, wb_ref, o_ref, y_ref):
    # x_ref: (rt, D) token tile; g/b: (1, D) LayerNorm affine params;
    # w_ref: (D, tn) weight tile (resident when tn == D_out);
    # wb_ref: (1, tn) bias tile; y_ref: (rt, D) VMEM scratch with LN(x).
    j = pl.program_id(1)

    # LayerNorm once per row tile; the column axis is the inner sequential
    # axis, so the cached normalized tile stays valid across column tiles.
    @pl.when(j == 0)
    def _():
        x = x_ref[...].astype(jnp.float32)
        inv_d = 1.0 / x.shape[-1]                       # multiply, not divide
        mean = jnp.sum(x, axis=-1, keepdims=True) * inv_d
        xc = x - mean
        var = jnp.sum(xc * xc, axis=-1, keepdims=True) * inv_d
        xn = xc * jax.lax.rsqrt(var + EPS)              # biased var, eps inside
        y = xn * g_ref[...].astype(jnp.float32) + b_ref[...].astype(jnp.float32)
        y_ref[...] = y.astype(y_ref.dtype)

    # fn := Linear(D -> D_out), native-dtype MXU operands, f32 accumulation.
    out = jnp.dot(y_ref[...], w_ref[...], preferred_element_type=jnp.float32)
    out = out + wb_ref[...].astype(jnp.float32)
    o_ref[...] = out.astype(o_ref.dtype)


def _round_up(a, b):
    return (a + b - 1) // b * b


def _min_sublane(dtype):
    # Minimum sublane tile: 8 for 32-bit, 16 for 16-bit, 32 for 8-bit dtypes.
    return max(8, 32 // jnp.dtype(dtype).itemsize)


def _vmem_capacity_bytes():
    try:
        return int(pltpu.get_tpu_info().vmem_capacity_bytes)
    except Exception:
        return 64 * _MIB  # conservative: v7x per-TensorCore VMEM


def _pick_row_tile(R, max_tile, align):
    """Largest multiple of `align` dividing R (capped at max_tile), preferring
    >=4 row tiles (megacore).  Falls back to padding if no divisor exists."""
    cands = [t for t in range(align, min(max_tile, R) + 1, align) if R % t == 0]
    if cands:
        enough = [t for t in cands if R // t >= 4]
        rt = max(enough) if enough else max(cands)
        return rt, R
    rt = min(max_tile, _round_up(R, align))
    return rt, _round_up(R, rt)


def _pick_col_tile(D_out, max_tile):
    if D_out <= max_tile:
        return D_out
    for t in range(max_tile, 127, -128):
        if D_out % t == 0:
            return t
    return D_out


def prenorm(x, ln_gamma, ln_beta, w, w_bias, *, row_tile=256, col_tile=1024):
    """out = Linear(LayerNorm(x)); x: (B, N, D), w: (D, D_out) -> (B, N, D_out)."""
    B, N, D = x.shape
    D_out = w.shape[1]
    R = B * N

    out_dtype = x.dtype
    compute_dtype = w.dtype                 # MXU operand dtype (bf16 for real ViTs)
    x_bytes = jnp.dtype(x.dtype).itemsize
    w_bytes = jnp.dtype(w.dtype).itemsize
    o_bytes = jnp.dtype(out_dtype).itemsize
    c_bytes = jnp.dtype(compute_dtype).itemsize

    align = _min_sublane(x.dtype)           # 16 for bf16 inputs, 8 for f32
    rt, R_pad = _pick_row_tile(R, row_tile, align)

    vmem_cap = _vmem_capacity_bytes()
    budget = vmem_cap // 2                  # leave headroom for compiler scratch

    def footprint(tn):
        # Pipelined operands are double-buffered; LN scratch is single.
        return (2 * rt * D * x_bytes         # x row tiles
                + 2 * D * tn * w_bytes       # weight tiles
                + 2 * rt * tn * o_bytes      # out tiles
                + 4 * D * x_bytes            # gamma + beta (resident)
                + 2 * tn * w_bytes           # bias tile
                + rt * D * c_bytes)          # cached LN(x)

    # Weight-resident fast path vs column-tiled fallback.
    if footprint(D_out) <= budget:
        tn = D_out
    else:
        tn = _pick_col_tile(D_out, col_tile)
        while tn % 256 == 0 and footprint(tn) > budget:
            tn //= 2

    x2 = x.reshape(R, D)
    if R_pad != R:
        # Fallback only; zero rows are finite under LayerNorm (var=0 ->
        # rsqrt(eps)) and the padded outputs are sliced off below.
        x2 = jnp.pad(x2, ((0, R_pad - R), (0, 0)))

    g2 = ln_gamma.reshape(1, D)
    b2 = ln_beta.reshape(1, D)
    wb2 = w_bias.reshape(1, D_out)

    grid = (R_pad // rt, D_out // tn)
    vmem_limit = int(min(vmem_cap, max(16 * _MIB, footprint(tn) + 8 * _MIB)))

    out = pl.pallas_call(
        prenorm_kernel,
        out_shape=jax.ShapeDtypeStruct((R_pad, D_out), out_dtype),
        grid_spec=pltpu.PrefetchScalarGridSpec(
            num_scalar_prefetch=0,
            grid=grid,
            in_specs=[
                pl.BlockSpec((rt, D), lambda i, j: (i, 0)),   # x row tile
                pl.BlockSpec((1, D), lambda i, j: (0, 0)),    # gamma (resident)
                pl.BlockSpec((1, D), lambda i, j: (0, 0)),    # beta  (resident)
                pl.BlockSpec((D, tn), lambda i, j: (0, j)),   # weight (resident when tn == D_out)
                pl.BlockSpec((1, tn), lambda i, j: (0, j)),   # bias tile
            ],
            out_specs=pl.BlockSpec((rt, tn), lambda i, j: (i, j)),
            scratch_shapes=[pltpu.VMEM((rt, D), compute_dtype)],  # cached LN(x)
        ),
        compiler_params=pltpu.CompilerParams(
            # rows "parallel" (megacore sharding on v7x); column axis must be
            # sequential so the cached normalized tile is reused correctly.
            dimension_semantics=("parallel", "arbitrary"),
            vmem_limit_bytes=vmem_limit,
        ),
    )(x2, g2, b2, w, wb2)

    if R_pad != R:
        out = out[:R]
    return out.reshape(B, N, D_out)


def prenorm_reference(x, ln_gamma, ln_beta, w, w_bias):
    xf = x.astype(jnp.float32)
    mean = jnp.mean(xf, axis=-1, keepdims=True)
    var = jnp.mean((xf - mean) ** 2, axis=-1, keepdims=True)
    xn = (xf - mean) / jnp.sqrt(var + EPS)
    y = xn * ln_gamma.astype(jnp.float32) + ln_beta.astype(jnp.float32)
    return y @ w.astype(jnp.float32) + w_bias.astype(jnp.float32)


if __name__ == "__main__":
    key = jax.random.PRNGKey(0)

    # ---- Case 1: small toy shape (matches the module's minimal config) ----
    B, N, D = 2, 8, 32
    kx, kw = jax.random.split(key)
    x = jax.random.normal(kx, (B, N, D), dtype=jnp.float32)
    ln_gamma = jnp.ones((D,), dtype=jnp.float32)   # torch LayerNorm default init
    ln_beta = jnp.zeros((D,), dtype=jnp.float32)
    w = jax.random.normal(kw, (D, D), dtype=jnp.float32) * 0.02
    w_bias = jnp.zeros((D,), dtype=jnp.float32)

    out = jax.block_until_ready(prenorm(x, ln_gamma, ln_beta, w, w_bias))
    ref = prenorm_reference(x, ln_gamma, ln_beta, w, w_bias)
    assert out.shape == (B, N, D)
    assert jnp.allclose(out.astype(jnp.float32), ref, atol=1e-4, rtol=1e-4), \
        "mismatch vs reference (f32 case)"

    # ---- Case 2: exercise the multi-row-tile, bf16, weight-resident path ----
    B2, N2, D2, DO2 = 2, 256, 256, 512
    k1, k2, k3, k4 = jax.random.split(key, 4)
    x2 = jax.random.normal(k1, (B2, N2, D2), dtype=jnp.bfloat16)
    g2 = (1.0 + 0.1 * jax.random.normal(k2, (D2,))).astype(jnp.bfloat16)
    b2 = (0.1 * jax.random.normal(k3, (D2,))).astype(jnp.bfloat16)
    w2 = (jax.random.normal(k4, (D2, DO2)) * 0.02).astype(jnp.bfloat16)
    wb2 = jnp.zeros((DO2,), dtype=jnp.bfloat16)

    out2 = jax.block_until_ready(prenorm(x2, g2, b2, w2, wb2))
    ref2 = prenorm_reference(x2, g2, b2, w2, wb2)
    assert out2.shape == (B2, N2, DO2)
    assert jnp.allclose(out2.astype(jnp.float32), ref2, atol=5e-2, rtol=5e-2), \
        "mismatch vs reference (bf16 tiled case)"

    print("KERNEL_OK")
</pallas_src>

<mosaic_0001>
module attributes {stable_mosaic.version = 11 : i64} {
  func.func @prenorm_kernel(%arg0: i32, %arg1: i32, %arg2: memref<16x32xf32, #tpu.memory_space<vmem>>, %arg3: memref<1x32xf32, #tpu.memory_space<vmem>>, %arg4: memref<1x32xf32, #tpu.memory_space<vmem>>, %arg5: memref<32x32xf32, #tpu.memory_space<vmem>>, %arg6: memref<1x32xf32, #tpu.memory_space<vmem>>, %arg7: memref<16x32xf32, #tpu.memory_space<vmem>>, %arg8: memref<16x32xf32, #tpu.memory_space<vmem>>) attributes {dimension_semantics = [#tpu.dimension_semantics<parallel>, #tpu.dimension_semantics<arbitrary>], iteration_bounds = array<i64: 1, 1>, scalar_prefetch = 0 : i64, scratch_operands = 1 : i64, tpu.core_type = #tpu.core_type<tc>, window_params = [{transform_indices = @transform_0, window_bounds = array<i64: 16, 32>}, {pipeline_mode = #tpu.pipeline_mode<synchronous>, transform_indices = @transform_1, window_bounds = array<i64: 1, 32>}, {pipeline_mode = #tpu.pipeline_mode<synchronous>, transform_indices = @transform_2, window_bounds = array<i64: 1, 32>}, {transform_indices = @transform_3, window_bounds = array<i64: 32, 32>}, {transform_indices = @transform_4, window_bounds = array<i64: 1, 32>}, {transform_indices = @transform_5, window_bounds = array<i64: 16, 32>}]} {
    %c0_i32 = arith.constant 0 : i32
    %0 = arith.cmpi eq, %arg1, %c0_i32 : i32
    %1 = arith.extui %0 : i1 to i32
    %c0_i32_0 = arith.constant 0 : i32
    %2 = arith.cmpi ne, %1, %c0_i32_0 : i32
    scf.if %2 {
      %c0_8 = arith.constant 0 : index
      %c0_9 = arith.constant 0 : index
      %10 = vector.load %arg2[%c0_8, %c0_9] : memref<16x32xf32, #tpu.memory_space<vmem>>, vector<16x32xf32>
      %cst_10 = arith.constant dense<0.000000e+00> : vector<16xf32>
      %11 = vector.multi_reduction <add>, %10, %cst_10 [1] : vector<16x32xf32> to vector<16xf32>
      %12 = vector.shape_cast %11 : vector<16xf32> to vector<16x1xf32>
      %cst_11 = arith.constant 3.125000e-02 : f32
      %13 = vector.broadcast %cst_11 : f32 to vector<16x1xf32>
      %14 = arith.mulf %12, %13 : vector<16x1xf32>
      %15 = vector.broadcast %14 : vector<16x1xf32> to vector<16x32xf32>
      %16 = arith.subf %10, %15 : vector<16x32xf32>
      %17 = arith.mulf %16, %16 : vector<16x32xf32>
      %cst_12 = arith.constant dense<0.000000e+00> : vector<16xf32>
      %18 = vector.multi_reduction <add>, %17, %cst_12 [1] : vector<16x32xf32> to vector<16xf32>
      %19 = vector.shape_cast %18 : vector<16xf32> to vector<16x1xf32>
      %cst_13 = arith.constant 3.125000e-02 : f32
      %20 = vector.broadcast %cst_13 : f32 to vector<16x1xf32>
      %21 = arith.mulf %19, %20 : vector<16x1xf32>
      %cst_14 = arith.constant 9.99999974E-6 : f32
      %22 = vector.broadcast %cst_14 : f32 to vector<16x1xf32>
      %23 = arith.addf %21, %22 : vector<16x1xf32>
      %24 = math.rsqrt %23 : vector<16x1xf32>
      %25 = vector.broadcast %24 : vector<16x1xf32> to vector<16x32xf32>
      %26 = arith.mulf %16, %25 : vector<16x32xf32>
      %c0_15 = arith.constant 0 : index
      %c0_16 = arith.constant 0 : index
      %27 = vector.load %arg3[%c0_15, %c0_16] : memref<1x32xf32, #tpu.memory_space<vmem>>, vector<1x32xf32>
      %28 = vector.broadcast %27 : vector<1x32xf32> to vector<16x32xf32>
      %29 = arith.mulf %26, %28 : vector<16x32xf32>
      %c0_17 = arith.constant 0 : index
      %c0_18 = arith.constant 0 : index
      %30 = vector.load %arg4[%c0_17, %c0_18] : memref<1x32xf32, #tpu.memory_space<vmem>>, vector<1x32xf32>
      %31 = vector.broadcast %30 : vector<1x32xf32> to vector<16x32xf32>
      %32 = arith.addf %29, %31 : vector<16x32xf32>
      %c0_19 = arith.constant 0 : index
      %c0_20 = arith.constant 0 : index
      %33 = vector.load %arg8[%c0_19, %c0_20] : memref<16x32xf32, #tpu.memory_space<vmem>>, vector<16x32xf32>
      tpu.vector_store %arg8[%c0_19, %c0_20], %32 {strides = array<i32>} : memref<16x32xf32, #tpu.memory_space<vmem>>, vector<16x32xf32>,
    } else {
    }
    %c0 = arith.constant 0 : index
    %c0_1 = arith.constant 0 : index
    %3 = vector.load %arg8[%c0, %c0_1] : memref<16x32xf32, #tpu.memory_space<vmem>>, vector<16x32xf32>
    %c0_2 = arith.constant 0 : index
    %c0_3 = arith.constant 0 : index
    %4 = vector.load %arg5[%c0_2, %c0_3] : memref<32x32xf32, #tpu.memory_space<vmem>>, vector<32x32xf32>
    %cst = arith.constant dense<0.000000e+00> : vector<16x32xf32>
    %5 = tpu.matmul %3, %4, %cst {dimension_numbers = #tpu.dot_dimension_numbers<[1], [0], [0], [1], [0, 0, 1, 1], [], []>} : vector<16x32xf32>, vector<32x32xf32>, vector<16x32xf32> -> vector<16x32xf32>
    %c0_4 = arith.constant 0 : index
    %c0_5 = arith.constant 0 : index
    %6 = vector.load %arg6[%c0_4, %c0_5] : memref<1x32xf32, #tpu.memory_space<vmem>>, vector<1x32xf32>
    %7 = vector.broadcast %6 : vector<1x32xf32> to vector<16x32xf32>
    %8 = arith.addf %5, %7 : vector<16x32xf32>
    %c0_6 = arith.constant 0 : index
    %c0_7 = arith.constant 0 : index
    %9 = vector.load %arg7[%c0_6, %c0_7] : memref<16x32xf32, #tpu.memory_space<vmem>>, vector<16x32xf32>
    tpu.vector_store %arg7[%c0_6, %c0_7], %8 {strides = array<i32>} : memref<16x32xf32, #tpu.memory_space<vmem>>, vector<16x32xf32>,
    return
  }
  func.func @transform_0(%arg0: i32, %arg1: i32) -> (i32, i32) {
    %c0_i32 = arith.constant 0 : i32
    %c0_i32_0 = arith.constant 0 : i32
    return %arg0, %c0_i32 : i32, i32
  }
  func.func @transform_1(%arg0: i32, %arg1: i32) -> (i32, i32) {
    %c0_i32 = arith.constant 0 : i32
    %c0_i32_0 = arith.constant 0 : i32
    %c0_i32_1 = arith.constant 0 : i32
    return %c0_i32, %c0_i32_0 : i32, i32
  }
  func.func @transform_2(%arg0: i32, %arg1: i32) -> (i32, i32) {
    %c0_i32 = arith.constant 0 : i32
    %c0_i32_0 = arith.constant 0 : i32
    %c0_i32_1 = arith.constant 0 : i32
    return %c0_i32, %c0_i32_0 : i32, i32
  }
  func.func @transform_3(%arg0: i32, %arg1: i32) -> (i32, i32) {
    %c0_i32 = arith.constant 0 : i32
    %c0_i32_0 = arith.constant 0 : i32
    return %c0_i32, %arg1 : i32, i32
  }
  func.func @transform_4(%arg0: i32, %arg1: i32) -> (i32, i32) {
    %c0_i32 = arith.constant 0 : i32
    %c0_i32_0 = arith.constant 0 : i32
    return %c0_i32, %arg1 : i32, i32
  }
  func.func @transform_5(%arg0: i32, %arg1: i32) -> (i32, i32) {
    %c0_i32 = arith.constant 0 : i32
    return %arg0, %arg1 : i32, i32
  }
}

</mosaic_0001>

<llo_original>
// kernel: tpu_custom_call.1
$region0: #{tpu_custom_call.1}
  #allocation0 [shape = 'u32[]', space=smem, size = 0x4, offset = 0x4, fixed_abs, tag = 'smem constant byte address 0x4 - core index']
  #allocation1 [shape = 'u32[144,128]{1,0:T(1,128)}', space=vmem, size = 0x12000, scoped, tag = 'internal scratch']
  #allocation2 [shape = 'f32[16,32]{1,0:T(8,128)}', space=vmem, size = 0x2000, scoped, tag = 'scratch operand']
  %s0 = inlined_call_operand.hbm [shape: f32[16,32], index: 0, kind: input, shape index: {}]
  %s1 = inlined_call_operand.vmem [shape: f32[1,32], index: 1, kind: input, shape index: {}]
  %s2 = inlined_call_operand.vmem [shape: f32[1,32], index: 2, kind: input, shape index: {}]
  %s3 = inlined_call_operand.hbm [shape: f32[32,32], index: 3, kind: input, shape index: {}]
  %s4 = inlined_call_operand.vmem [shape: f32[1,32], index: 4, kind: input, shape index: {}]
  %s5 = inlined_call_operand.hbm [shape: f32[16,32], index: 5, kind: output, shape index: {}]
  %s6 = sld [smem:[#allocation0]]
  $region42: #{tpu_custom_call.1} parent=0
    _
  %s8 = ssub.s32 1, %s6
  %s9 = scalar_select 0, %s8, %s6
  $region1: #{tpu_custom_call.1} parent=0
    #allocation3 [shape = 'u8[8192]{0}', space=vmem, size = 0x2000, scoped, tag = 'input window, operand 0, single buffered']
    #allocation4 [shape = 's32[1]{0}', space=sflag, size = 0x4, scoped, tag = 'scoped memory for tpu_custom_call.1']
    #allocation5 [shape = 's32[1]{0}', space=sflag, size = 0x4, scoped, tag = 'scoped memory for tpu_custom_call.1']
    #allocation6 [shape = 'u8[16384]{0}', space=vmem, size = 0x4000, scoped, tag = 'input window, operand 3, single buffered']
    #allocation7 [shape = 's32[1]{0}', space=sflag, size = 0x4, scoped, tag = 'scoped memory for tpu_custom_call.1']
    #allocation8 [shape = 'u8[8192]{0}', space=vmem, size = 0x2000, scoped, tag = 'output window, operand 0, single buffered']
    %10 = vsyncpa [#allocation4], 0
    %11 = vsyncpa [#allocation7], 0
    %12 = vsyncpa [#allocation5], 0
    // Predicated region
    $region2: #{tpu_custom_call.1} parent=1 // pred_check
      _
    $region3: #{tpu_custom_call.1} parent=1 // pred_check_branch
      %14 = sbr.rel (0) target = $region5
    $region4: #{tpu_custom_call.1} parent=1 // pred_region
      %s16 = ssub.s32 256, 256
      %17 = vsyncadd [#allocation4], %s16
      %s18 = sshll.u32 [#allocation3], 4
      %s19 = int_to_ptr.vmem [resolvable:$true] %s18
      %24 = dma.hbm_to_vmem [thread:$0]  %s0, 256, %s19, [#allocation4], 128, 128, 8
    $region5: #{tpu_custom_call.1} parent=1 // pred_fallthru
      _
    // Predicated region
    $region6: #{tpu_custom_call.1} parent=1 // pred_check
      _
    $region7: #{tpu_custom_call.1} parent=1 // pred_check_branch
      %26 = sbr.rel (0) target = $region9
    $region8: #{tpu_custom_call.1} parent=1 // pred_region
      _
    $region9: #{tpu_custom_call.1} parent=1 // pred_fallthru
      _
    // Predicated region
    $region10: #{tpu_custom_call.1} parent=1 // pred_check
      _
    $region11: #{tpu_custom_call.1} parent=1 // pred_check_branch
      %28 = sbr.rel (0) target = $region13
    $region12: #{tpu_custom_call.1} parent=1 // pred_region
      _
    $region13: #{tpu_custom_call.1} parent=1 // pred_fallthru
      _
    // Predicated region
    $region14: #{tpu_custom_call.1} parent=1 // pred_check
      _
    $region15: #{tpu_custom_call.1} parent=1 // pred_check_branch
      %30 = sbr.rel (0) target = $region17
    $region16: #{tpu_custom_call.1} parent=1 // pred_region
      %s32 = ssub.s32 512, 512
      %33 = vsyncadd [#allocation7], %s32
      %s34 = sshll.u32 [#allocation6], 4
      %s35 = int_to_ptr.vmem [resolvable:$true] %s34
      %40 = dma.hbm_to_vmem [thread:$0]  %s3, 512, %s35, [#allocation7], 128, 128, 8
    $region17: #{tpu_custom_call.1} parent=1 // pred_fallthru
      _
    // Predicated region
    $region18: #{tpu_custom_call.1} parent=1 // pred_check
      _
    $region19: #{tpu_custom_call.1} parent=1 // pred_check_branch
      %42 = sbr.rel (0) target = $region21
    $region20: #{tpu_custom_call.1} parent=1 // pred_region
      _
    $region21: #{tpu_custom_call.1} parent=1 // pred_fallthru
      _
    // Predicated region
    $region22: #{tpu_custom_call.1} parent=1 // pred_check
      _
    $region23: #{tpu_custom_call.1} parent=1 // pred_check_branch
      %44 = sbr.rel (0) target = $region25
    $region24: #{tpu_custom_call.1} parent=1 // pred_region
      %45 = dma.done [#allocation4], 256
    $region25: #{tpu_custom_call.1} parent=1 // pred_fallthru
      _
    // Predicated region
    $region26: #{tpu_custom_call.1} parent=1 // pred_check
      _
    $region27: #{tpu_custom_call.1} parent=1 // pred_check_branch
      %47 = sbr.rel (0) target = $region29
    $region28: #{tpu_custom_call.1} parent=1 // pred_region
      %48 = dma.done [#allocation7], 512
    $region29: #{tpu_custom_call.1} parent=1 // pred_fallthru
      _
    %p49 = scmp.eq.s32.totalorder 0, 0
    // Predicated region
    $region30: #{tpu_custom_call.1} parent=1 // pred_check
      %p50 = pneg %p49
    $region31: #{tpu_custom_call.1} parent=1 // pred_check_branch
      %52 = sbr.rel (%p50) target = $region33
    $region32: #{tpu_custom_call.1} parent=1 // pred_region
      %v53 = vld [vmem:[#allocation3] sm:$0xff]
      %v54 = vld [vmem:[#allocation3 + $0x8] sm:$0xff]
      %vm55 = vcmask 261120
      %v56 = vsel %vm55, %v53, 0.0
      %57 = vadd.xlane.f32.xlu0 %v56
      %v58 = vpop.xlane.xlu0 %57
      %v59 = vsel %vm55, %v54, 0.0
      %60 = vadd.xlane.f32.xlu0 %v59
      %v61 = vpop.xlane.xlu0 %60
      %v62 = vmul.f32 %v58, 0.03125
      %v63 = vmul.f32 %v61, 0.03125
      %v64 = vsub.f32 %v53, %v62
      %v65 = vsub.f32 %v54, %v63
      %v66 = vmul.f32 %v64, %v64
      %v67 = vmul.f32 %v65, %v65
      %v68 = vsel %vm55, %v66, 0.0
      %69 = vadd.xlane.f32.xlu0 %v68
      %v70 = vpop.xlane.xlu0 %69
      %v71 = vsel %vm55, %v67, 0.0
      %72 = vadd.xlane.f32.xlu0 %v71
      %v73 = vpop.xlane.xlu0 %72
      %v74 = vmul.f32 %v70, 0.03125
      %v75 = vmul.f32 %v73, 0.03125
      %v76 = vadd.f32 %v74, 1e-05
      %v77 = vadd.f32 %v75, 1e-05
      %v78 = vrsqrt.pop %v76
      %v79 = vrsqrt.pop %v77
      %v80 = vmul.f32 %v64, %v78
      %v81 = vmul.f32 %v65, %v79
      %v82 = vld [vmem:[%s1] sm:$0x1]
      %v84 = vlaneseq
      %v85 = vshrl.u32 %v84, 7
      %v86 = vsub.s32 0, %v85
      %v87 = vrot.slane %v82, %v86
      %v89 = vmul.f32 %v80, %v87
      %v90 = vmul.f32 %v81, %v87
      %v91 = vld [vmem:[%s2] sm:$0x1]
      %v93 = vlaneseq
      %v94 = vshrl.u32 %v93, 7
      %v95 = vsub.s32 0, %v94
      %v96 = vrot.slane %v91, %v95
      %v98 = vadd.f32 %v89, %v96
      %v99 = vadd.f32 %v90, %v96
      %100 = vst.msk [vmem:[#allocation2] sm:$0xff] %vm55, %v98
      %101 = vst.msk [vmem:[#allocation2 + $0x8] sm:$0xff] %vm55, %v99
    $region33: #{tpu_custom_call.1} parent=1 // pred_fallthru
      _
    %v102 = vld [vmem:[#allocation2] sm:$0xff]
    %v103 = vld [vmem:[#allocation2 + $0x8] sm:$0xff]
    %v104 = vld [vmem:[#allocation6] sm:$0xff]
    %v105 = vld [vmem:[#allocation6 + $0x8] sm:$0xff]
    %v106 = vld [vmem:[#allocation6 + $0x10] sm:$0xff]
    %v107 = vld [vmem:[#allocation6 + $0x18] sm:$0xff]
    %v108 = vld [vmem:[%s4] sm:$0x1]
    %v110 = vlaneseq
    %v111 = vshrl.u32 %v110, 7
    %v112 = vsub.s32 0, %v111
    %v113 = vrot.slane %v108, %v112
    %vm115 = vcmask 261120
    %v117 = vsel %vm115, %v102, 0
    %v120 = vsel %vm115, %v103, 0
    %122 = vmatprep.subr.mxu0 0.0
    %123 = vmatpush1.msra.mxu0 %v104
    %124 = vmatprep.subr.mxu0 0.0
    %125 = vmatpush1.msra.mxu0 %v105
    %126 = vmatprep.subr.mxu0 0.0
    %127 = vmatpush1.msra.mxu0 %v106
    %128 = vmatprep.subr.mxu0 0.0
    %129 = vmatpush1.msra.mxu0 %v107
    %130 = vmatprep.subr.mxu0 0.0
    %131 = vmatpush1.msra.mxu0 0.0
    %132 = vmatprep.subr.mxu0 0.0
    %133 = vmatpush1.msra.mxu0 0.0
    %134 = vmatprep.subr.mxu0 0.0
    %135 = vmatpush1.msra.mxu0 0.0
    %136 = vmatprep.subr.mxu0 0.0
    %137 = vmatpush1.msra.mxu0 0.0
    %138 = vmatprep.subr.mxu0 0.0
    %139 = vmatpush1.msra.mxu0 0.0
    %140 = vmatprep.subr.mxu0 0.0
    %141 = vmatpush1.msra.mxu0 0.0
    %142 = vmatprep.subr.mxu0 0.0
    %143 = vmatpush1.msra.mxu0 0.0
    %144 = vmatprep.subr.mxu0 0.0
    %145 = vmatpush1.msra.mxu0 0.0
    %146 = vmatprep.subr.mxu0 0.0
    %147 = vmatpush1.msra.mxu0 0.0
    %148 = vmatprep.subr.mxu0 0.0
    %149 = vmatpush1.msra.mxu0 0.0
    %150 = vmatprep.subr.mxu0 0.0
    %151 = vmatpush1.msra.mxu0 0.0
    %152 = vmatprep.subr.mxu0 0.0
    %153 = vmatpush1.msra.mxu0 0.0
    %154 = vmatprep.subr.mxu0 0.0
    %155 = vmatpush1.msra.mxu0 0.0
    %156 = vmatprep.subr.mxu0 0.0
    %157 = vmatpush1.msra.mxu0 0.0
    %158 = vmatprep.subr.mxu0 0.0
    %159 = vmatpush1.msra.mxu0 0.0
    %160 = vmatprep.subr.mxu0 0.0
    %161 = vmatpush1.msra.mxu0 0.0
    %162 = vmatprep.subr.mxu0 0.0
    %163 = vmatpush1.msra.mxu0 0.0
    %164 = vmatprep.subr.mxu0 0.0
    %165 = vmatpush1.msra.mxu0 0.0
    %166 = vmatprep.subr.mxu0 0.0
    %167 = vmatpush1.msra.mxu0 0.0
    %168 = vmatprep.subr.mxu0 0.0
    %169 = vmatpush1.msra.mxu0 0.0
    %170 = vmatprep.subr.mxu0 0.0
    %171 = vmatpush1.msra.mxu0 0.0
    %172 = vmatprep.subr.mxu0 0.0
    %173 = vmatpush1.msra.mxu0 0.0
    %174 = vmatprep.subr.mxu0 0.0
    %175 = vmatpush1.msra.mxu0 0.0
    %176 = vmatprep.subr.mxu0 0.0
    %177 = vmatpush1.msra.mxu0 0.0
    %178 = vmatprep.subr.mxu0 0.0
    %179 = vmatpush1.msra.mxu0 0.0
    %180 = vmatprep.subr.mxu0 0.0
    %181 = vmatpush1.msra.mxu0 0.0
    %182 = vmatprep.subr.mxu0 0.0
    %183 = vmatpush1.msra.mxu0 0.0
    %184 = vmatprep.subr.mxu0 0.0
    %185 = vmatpush1.msra.mxu0 0.0
    %186 = vmatprep.mubr.f32.mxu0 0.0
    %187 = vmatmul.mubr.f32.gmra.mrb[0].mxu0 %v117
    %v188 = vpop.f32.mrb[0].mxu0
    %v189 = vadd.f32 %v113, %v188
    %v190 = vpop.f32.mrb[0].mxu0
    %191 = vmatprep.mubr.f32.mxu0 0.0
    %192 = vmatmul.mubr.f32.gmra.mrb[0].mxu0 %v120
    %v193 = vpop.f32.mrb[0].mxu0
    %v194 = vadd.f32 %v113, %v193
    %v195 = vpop.f32.mrb[0].mxu0
    %196 = vdwg.mxu0
    %197 = vst.msk [vmem:[#allocation8] sm:$0xff] %vm115, %v189
    %198 = vst.msk [vmem:[#allocation8 + $0x8] sm:$0xff] %vm115, %v194
    // Predicated region
    $region34: #{tpu_custom_call.1} parent=1 // pred_check
      _
    $region35: #{tpu_custom_call.1} parent=1 // pred_check_branch
      %200 = sbr.rel (0) target = $region37
    $region36: #{tpu_custom_call.1} parent=1 // pred_region
      %s202 = ssub.s32 256, 256
      %203 = vsyncadd [#allocation5], %s202
      %s204 = sshll.u32 [#allocation8], 4
      %s205 = int_to_ptr.vmem [resolvable:$true] %s204
      %210 = dma.vmem_to_hbm [thread:$0]  %s205, 256, %s5, [#allocation5], 128, 128, 8
    $region37: #{tpu_custom_call.1} parent=1 // pred_fallthru
      _
    // Predicated region
    $region38: #{tpu_custom_call.1} parent=1 // pred_check
      _
    $region39: #{tpu_custom_call.1} parent=1 // pred_check_branch
      %212 = sbr.rel (0) target = $region41
    $region40: #{tpu_custom_call.1} parent=1 // pred_region
      %213 = dma.done [#allocation5], 256
    $region41: #{tpu_custom_call.1} parent=1 // pred_fallthru
      _
    %214 = vsyncpa [#allocation4], 1
    %215 = vsyncpa [#allocation7], 1
    %216 = vsyncpa [#allocation5], 1

</llo_original>
